<compile_context>
chip_gen: v7x
topology: tpu7x:2x2x1
jax: 0.10.0
libtpu: 0.0.40
codegen_flags: <defaults>
</compile_context>

<pallas_src>
import jax
import jax.numpy as jnp
from jax.experimental import pallas as pl
from jax.experimental.pallas import tpu as pltpu


_SUBCHUNK = 512  # batch columns processed per inner-loop iteration


def _round_up(x, m):
    return -(-x // m) * m


def _choose_tile(batch):
    """Batch-tile size (the lane axis of the transposed layout)."""
    if batch <= 256:
        return batch                          # single grid step; block == full dim
    if batch <= 1024:
        # >= 2 grid steps so both v7x TensorCores get work; 128-lane aligned.
        return _round_up(pl.cdiv(batch, 2), 128)
    # Large batches: big tiles (multiple of the sub-chunk) + in-kernel loop.
    return min(2048, _round_up(pl.cdiv(batch, 2), _SUBCHUNK))


def _make_kernel(tile_b):
    chunk = tile_b if tile_b <= _SUBCHUNK else _SUBCHUNK
    n_chunks = tile_b // chunk                # exact by construction of _choose_tile

    def kernel(x_ref, w1_ref, b1_ref, w2_ref, b2_ref, o_ref):
        w1 = w1_ref[...]                      # (H, S)  fc1 weight (PyTorch layout)
        b1 = b1_ref[...]                      # (H, 1)
        w2 = w2_ref[...]                      # (A, H)  fc2 weight
        b2 = b2_ref[...]                      # (A, 1)

        def compute(x):                       # x: (S, chunk), feature-major, lane-dense
            h = jnp.dot(w1, x, preferred_element_type=jnp.float32) + b1
            h = jnp.maximum(h, 0.0)                            # relu(fc1)
            logits = jnp.dot(w2, h, preferred_element_type=jnp.float32) + b2
            m = jnp.max(logits, axis=0, keepdims=True)         # softmax over actions
            e = jnp.exp(logits - m)
            return e / jnp.sum(e, axis=0, keepdims=True)       # exact divide

        if n_chunks == 1:
            o_ref[...] = compute(x_ref[...]).astype(o_ref.dtype)
        else:
            def body(c, carry):
                j = pl.multiple_of(c * chunk, chunk)
                o_ref[:, pl.ds(j, chunk)] = compute(
                    x_ref[:, pl.ds(j, chunk)]).astype(o_ref.dtype)
                return carry

            jax.lax.fori_loop(0, n_chunks, body, 0)

    return kernel


def vpg_forward(state, w1, b1, w2, b2):
    """Forward pass of VanillaPolicyGradientModel.

    Args:
      state: [B, S] float32 state batch.
      w1: [H, S], b1: [H]   -- fc1 params (PyTorch nn.Linear layout).
      w2: [A, H], b2: [A]   -- fc2 params.
    Returns:
      [B, A] softmax action probabilities (same as the PyTorch module).
    """
    B, S = state.shape
    H = w1.shape[0]
    A = w2.shape[0]

    tile_b = _choose_tile(B)
    grid = (pl.cdiv(B, tile_b),)

    # Feature-major activations: batch lives on the 128-lane axis everywhere.
    state_t = state.T                         # [S, B]
    b1c = b1.reshape(H, 1)
    b2c = b2.reshape(A, 1)

    out_t = pl.pallas_call(
        _make_kernel(tile_b),
        out_shape=jax.ShapeDtypeStruct((A, B), jnp.float32),
        grid_spec=pl.GridSpec(
            grid=grid,
            in_specs=[
                pl.BlockSpec((S, tile_b), lambda i: (0, i)),   # state tile
                pl.BlockSpec((H, S), lambda i: (0, 0)),        # W1 (VMEM-resident)
                pl.BlockSpec((H, 1), lambda i: (0, 0)),        # b1
                pl.BlockSpec((A, H), lambda i: (0, 0)),        # W2 (VMEM-resident)
                pl.BlockSpec((A, 1), lambda i: (0, 0)),        # b2
            ],
            out_specs=pl.BlockSpec((A, tile_b), lambda i: (0, i)),
        ),
        compiler_params=pltpu.CompilerParams(
            dimension_semantics=("parallel",),
        ),
    )(state_t, w1, b1c, w2, b2c)

    # Tiny [A, B] -> [B, A] transpose to preserve the PyTorch output layout
    # (A is ~8; consumers that can take the [A, B] layout should use out_t).
    return out_t.T


def init_params(key, state_size, hidden_dim, action_size):
    """nn.Linear-style init, PyTorch weight layout [out_features, in_features]."""
    k1, k2, k3, k4 = jax.random.split(key, 4)
    bound1 = 1.0 / jnp.sqrt(state_size)
    bound2 = 1.0 / jnp.sqrt(hidden_dim)
    w1 = jax.random.uniform(k1, (hidden_dim, state_size), jnp.float32, -bound1, bound1)
    b1 = jax.random.uniform(k2, (hidden_dim,), jnp.float32, -bound1, bound1)
    w2 = jax.random.uniform(k3, (action_size, hidden_dim), jnp.float32, -bound2, bound2)
    b2 = jax.random.uniform(k4, (action_size,), jnp.float32, -bound2, bound2)
    return w1, b1, w2, b2


if __name__ == "__main__":
    # Small shapes consistent with the module's forward.
    batch = 16
    state_size = 16
    hidden_dim = 32
    action_size = 8

    key = jax.random.PRNGKey(0)
    k_params, k_state = jax.random.split(key)
    w1, b1, w2, b2 = init_params(k_params, state_size, hidden_dim, action_size)
    state = jax.random.normal(k_state, (batch, state_size), jnp.float32)

    out = vpg_forward(state, w1, b1, w2, b2)
    out = jax.block_until_ready(out)

    # Pure-JAX reference of the module's forward pass.
    ref = jax.nn.softmax(jnp.maximum(state @ w1.T + b1, 0.0) @ w2.T + b2, axis=1)

    assert out.shape == (batch, action_size)
    assert jnp.allclose(jnp.sum(out, axis=1), 1.0, atol=1e-3)        # exact softmax divide
    assert jnp.allclose(out, ref, atol=5e-3, rtol=5e-3)              # MXU default-precision margin

    print("KERNEL_OK")
</pallas_src>

<mosaic_0001>
module attributes {stable_mosaic.version = 11 : i64} {
  func.func @kernel(%arg0: i32, %arg1: memref<16x16xf32, #tpu.memory_space<vmem>>, %arg2: memref<32x16xf32, #tpu.memory_space<vmem>>, %arg3: memref<32x1xf32, #tpu.memory_space<vmem>>, %arg4: memref<8x32xf32, #tpu.memory_space<vmem>>, %arg5: memref<8x1xf32, #tpu.memory_space<vmem>>, %arg6: memref<8x16xf32, #tpu.memory_space<vmem>>) attributes {dimension_semantics = [#tpu.dimension_semantics<parallel>], iteration_bounds = array<i64: 1>, scalar_prefetch = 0 : i64, scratch_operands = 0 : i64, tpu.core_type = #tpu.core_type<tc>, window_params = [{transform_indices = @transform_0, window_bounds = array<i64: 16, 16>}, {pipeline_mode = #tpu.pipeline_mode<synchronous>, transform_indices = @transform_1, window_bounds = array<i64: 32, 16>}, {pipeline_mode = #tpu.pipeline_mode<synchronous>, transform_indices = @transform_2, window_bounds = array<i64: 32, 1>}, {pipeline_mode = #tpu.pipeline_mode<synchronous>, transform_indices = @transform_3, window_bounds = array<i64: 8, 32>}, {pipeline_mode = #tpu.pipeline_mode<synchronous>, transform_indices = @transform_4, window_bounds = array<i64: 8, 1>}, {transform_indices = @transform_5, window_bounds = array<i64: 8, 16>}]} {
    %c0 = arith.constant 0 : index
    %c0_0 = arith.constant 0 : index
    %0 = vector.load %arg2[%c0, %c0_0] : memref<32x16xf32, #tpu.memory_space<vmem>>, vector<32x16xf32>
    %c0_1 = arith.constant 0 : index
    %c0_2 = arith.constant 0 : index
    %1 = vector.load %arg3[%c0_1, %c0_2] : memref<32x1xf32, #tpu.memory_space<vmem>>, vector<32x1xf32>
    %c0_3 = arith.constant 0 : index
    %c0_4 = arith.constant 0 : index
    %2 = vector.load %arg4[%c0_3, %c0_4] : memref<8x32xf32, #tpu.memory_space<vmem>>, vector<8x32xf32>
    %c0_5 = arith.constant 0 : index
    %c0_6 = arith.constant 0 : index
    %3 = vector.load %arg5[%c0_5, %c0_6] : memref<8x1xf32, #tpu.memory_space<vmem>>, vector<8x1xf32>
    %c0_7 = arith.constant 0 : index
    %c0_8 = arith.constant 0 : index
    %4 = vector.load %arg1[%c0_7, %c0_8] : memref<16x16xf32, #tpu.memory_space<vmem>>, vector<16x16xf32>
    %cst = arith.constant dense<0.000000e+00> : vector<32x16xf32>
    %5 = tpu.matmul %0, %4, %cst {dimension_numbers = #tpu.dot_dimension_numbers<[1], [0], [0], [1], [0, 0, 1, 1], [], []>} : vector<32x16xf32>, vector<16x16xf32>, vector<32x16xf32> -> vector<32x16xf32>
    %6 = vector.broadcast %1 : vector<32x1xf32> to vector<32x16xf32>
    %7 = arith.addf %5, %6 : vector<32x16xf32>
    %cst_9 = arith.constant 0.000000e+00 : f32
    %8 = vector.broadcast %cst_9 : f32 to vector<32x16xf32>
    %9 = arith.maximumf %7, %8 : vector<32x16xf32>
    %cst_10 = arith.constant dense<0.000000e+00> : vector<8x16xf32>
    %10 = tpu.matmul %2, %9, %cst_10 {dimension_numbers = #tpu.dot_dimension_numbers<[1], [0], [0], [1], [0, 0, 1, 1], [], []>} : vector<8x32xf32>, vector<32x16xf32>, vector<8x16xf32> -> vector<8x16xf32>
    %11 = vector.broadcast %3 : vector<8x1xf32> to vector<8x16xf32>
    %12 = arith.addf %10, %11 : vector<8x16xf32>
    %cst_11 = arith.constant dense<0xFF800000> : vector<16xf32>
    %13 = vector.multi_reduction <maximumf>, %12, %cst_11 [0] : vector<8x16xf32> to vector<16xf32>
    %14 = vector.shape_cast %13 : vector<16xf32> to vector<1x16xf32>
    %15 = vector.broadcast %14 : vector<1x16xf32> to vector<8x16xf32>
    %16 = arith.subf %12, %15 : vector<8x16xf32>
    %17 = math.exp %16 : vector<8x16xf32>
    %cst_12 = arith.constant dense<0.000000e+00> : vector<16xf32>
    %18 = vector.multi_reduction <add>, %17, %cst_12 [0] : vector<8x16xf32> to vector<16xf32>
    %19 = vector.shape_cast %18 : vector<16xf32> to vector<1x16xf32>
    %20 = vector.broadcast %19 : vector<1x16xf32> to vector<8x16xf32>
    %21 = arith.divf %17, %20 : vector<8x16xf32>
    %c0_13 = arith.constant 0 : index
    %c0_14 = arith.constant 0 : index
    %22 = vector.load %arg6[%c0_13, %c0_14] : memref<8x16xf32, #tpu.memory_space<vmem>>, vector<8x16xf32>
    tpu.vector_store %arg6[%c0_13, %c0_14], %21 {strides = array<i32>} : memref<8x16xf32, #tpu.memory_space<vmem>>, vector<8x16xf32>,
    return
  }
  func.func @transform_0(%arg0: i32) -> (i32, i32) {
    %c0_i32 = arith.constant 0 : i32
    %c0_i32_0 = arith.constant 0 : i32
    return %c0_i32, %arg0 : i32, i32
  }
  func.func @transform_1(%arg0: i32) -> (i32, i32) {
    %c0_i32 = arith.constant 0 : i32
    %c0_i32_0 = arith.constant 0 : i32
    %c0_i32_1 = arith.constant 0 : i32
    return %c0_i32, %c0_i32_0 : i32, i32
  }
  func.func @transform_2(%arg0: i32) -> (i32, i32) {
    %c0_i32 = arith.constant 0 : i32
    %c0_i32_0 = arith.constant 0 : i32
    %c0_i32_1 = arith.constant 0 : i32
    return %c0_i32, %c0_i32_0 : i32, i32
  }
  func.func @transform_3(%arg0: i32) -> (i32, i32) {
    %c0_i32 = arith.constant 0 : i32
    %c0_i32_0 = arith.constant 0 : i32
    %c0_i32_1 = arith.constant 0 : i32
    return %c0_i32, %c0_i32_0 : i32, i32
  }
  func.func @transform_4(%arg0: i32) -> (i32, i32) {
    %c0_i32 = arith.constant 0 : i32
    %c0_i32_0 = arith.constant 0 : i32
    %c0_i32_1 = arith.constant 0 : i32
    return %c0_i32, %c0_i32_0 : i32, i32
  }
  func.func @transform_5(%arg0: i32) -> (i32, i32) {
    %c0_i32 = arith.constant 0 : i32
    %c0_i32_0 = arith.constant 0 : i32
    return %c0_i32, %arg0 : i32, i32
  }
}

</mosaic_0001>

<llo_original>
// kernel: tpu_custom_call.1
$region0: #{tpu_custom_call.1}
  #allocation0 [shape = 'u32[]', space=smem, size = 0x4, offset = 0x4, fixed_abs, tag = 'smem constant byte address 0x4 - core index']
  #allocation1 [shape = 'u32[144,128]{1,0:T(1,128)}', space=vmem, size = 0x12000, scoped, tag = 'internal scratch']
  %s0 = inlined_call_operand.vmem [shape: f32[16,16], index: 0, kind: input, shape index: {}]
  %s1 = inlined_call_operand.vmem [shape: f32[32,16], index: 1, kind: input, shape index: {}]
  %s2 = inlined_call_operand.vmem [shape: f32[32,1], index: 2, kind: input, shape index: {}]
  %s3 = inlined_call_operand.vmem [shape: f32[8,32], index: 3, kind: input, shape index: {}]
  %s4 = inlined_call_operand.vmem [shape: f32[8,1], index: 4, kind: input, shape index: {}]
  %s5 = inlined_call_operand.hbm [shape: f32[8,16], index: 5, kind: output, shape index: {}]
  %s6 = sld [smem:[#allocation0]]
  $region30: #{tpu_custom_call.1} parent=0
    _
  %s8 = ssub.s32 1, %s6
  %s9 = scalar_select 0, %s8, %s6
  $region1: #{tpu_custom_call.1} parent=0
    #allocation2 [shape = 'u8[4096]{0}', space=vmem, size = 0x1000, scoped, tag = 'output window, operand 0, single buffered']
    #allocation3 [shape = 's32[1]{0}', space=sflag, size = 0x4, scoped, tag = 'scoped memory for tpu_custom_call.1']
    %10 = vsyncpa [#allocation3], 0
    // Predicated region
    $region2: #{tpu_custom_call.1} parent=1 // pred_check
      _
    $region3: #{tpu_custom_call.1} parent=1 // pred_check_branch
      %12 = sbr.rel (0) target = $region5
    $region4: #{tpu_custom_call.1} parent=1 // pred_region
      _
    $region5: #{tpu_custom_call.1} parent=1 // pred_fallthru
      _
    // Predicated region
    $region6: #{tpu_custom_call.1} parent=1 // pred_check
      _
    $region7: #{tpu_custom_call.1} parent=1 // pred_check_branch
      %14 = sbr.rel (0) target = $region9
    $region8: #{tpu_custom_call.1} parent=1 // pred_region
      _
    $region9: #{tpu_custom_call.1} parent=1 // pred_fallthru
      _
    // Predicated region
    $region10: #{tpu_custom_call.1} parent=1 // pred_check
      _
    $region11: #{tpu_custom_call.1} parent=1 // pred_check_branch
      %16 = sbr.rel (0) target = $region13
    $region12: #{tpu_custom_call.1} parent=1 // pred_region
      _
    $region13: #{tpu_custom_call.1} parent=1 // pred_fallthru
      _
    // Predicated region
    $region14: #{tpu_custom_call.1} parent=1 // pred_check
      _
    $region15: #{tpu_custom_call.1} parent=1 // pred_check_branch
      %18 = sbr.rel (0) target = $region17
    $region16: #{tpu_custom_call.1} parent=1 // pred_region
      _
    $region17: #{tpu_custom_call.1} parent=1 // pred_fallthru
      _
    // Predicated region
    $region18: #{tpu_custom_call.1} parent=1 // pred_check
      _
    $region19: #{tpu_custom_call.1} parent=1 // pred_check_branch
      %20 = sbr.rel (0) target = $region21
    $region20: #{tpu_custom_call.1} parent=1 // pred_region
      _
    $region21: #{tpu_custom_call.1} parent=1 // pred_fallthru
      _
    %v21 = vld [vmem:[%s1] sm:$0xff]
    %v22 = vld [vmem:[%s1 + $0x8] sm:$0xff]
    %v23 = vld [vmem:[%s1 + $0x10] sm:$0xff]
    %v24 = vld [vmem:[%s1 + $0x18] sm:$0xff]
    %v25 = vld [vmem:[%s2] sm:$0xff]
    %v26 = vld [vmem:[%s2 + $0x8] sm:$0xff]
    %v27 = vld [vmem:[%s2 + $0x10] sm:$0xff]
    %v28 = vld [vmem:[%s2 + $0x18] sm:$0xff]
    %v29 = vld [vmem:[%s3] sm:$0xff]
    %v30 = vld [vmem:[%s4] sm:$0xff]
    %v31 = vld [vmem:[%s0] sm:$0xff]
    %v32 = vld [vmem:[%s0 + $0x8] sm:$0xff]
    %34 = vset.pattern.permute.xlu0 0
    %35 = vperm.xlu0 %34, %v25
    %v36 = vpop.permute.xlu0 %35
    %39 = vset.pattern.permute.xlu0 0
    %40 = vperm.xlu0 %39, %v26
    %v41 = vpop.permute.xlu0 %40
    %44 = vset.pattern.permute.xlu0 0
    %45 = vperm.xlu0 %44, %v27
    %v46 = vpop.permute.xlu0 %45
    %49 = vset.pattern.permute.xlu0 0
    %50 = vperm.xlu0 %49, %v28
    %v51 = vpop.permute.xlu0 %50
    %vm53 = vcmask 130048
    %v55 = vsel %vm53, %v21, 0
    %v58 = vsel %vm53, %v22, 0
    %v61 = vsel %vm53, %v23, 0
    %v64 = vsel %vm53, %v24, 0
    %66 = vmatprep.subr.mxu0 0.0
    %67 = vmatpush1.msra.mxu0 %v31
    %68 = vmatprep.subr.mxu0 0.0
    %69 = vmatpush1.msra.mxu0 %v32
    %70 = vmatprep.subr.mxu0 0.0
    %71 = vmatpush1.msra.mxu0 0.0
    %72 = vmatprep.subr.mxu0 0.0
    %73 = vmatpush1.msra.mxu0 0.0
    %74 = vmatprep.subr.mxu0 0.0
    %75 = vmatpush1.msra.mxu0 0.0
    %76 = vmatprep.subr.mxu0 0.0
    %77 = vmatpush1.msra.mxu0 0.0
    %78 = vmatprep.subr.mxu0 0.0
    %79 = vmatpush1.msra.mxu0 0.0
    %80 = vmatprep.subr.mxu0 0.0
    %81 = vmatpush1.msra.mxu0 0.0
    %82 = vmatprep.subr.mxu0 0.0
    %83 = vmatpush1.msra.mxu0 0.0
    %84 = vmatprep.subr.mxu0 0.0
    %85 = vmatpush1.msra.mxu0 0.0
    %86 = vmatprep.subr.mxu0 0.0
    %87 = vmatpush1.msra.mxu0 0.0
    %88 = vmatprep.subr.mxu0 0.0
    %89 = vmatpush1.msra.mxu0 0.0
    %90 = vmatprep.subr.mxu0 0.0
    %91 = vmatpush1.msra.mxu0 0.0
    %92 = vmatprep.subr.mxu0 0.0
    %93 = vmatpush1.msra.mxu0 0.0
    %94 = vmatprep.subr.mxu0 0.0
    %95 = vmatpush1.msra.mxu0 0.0
    %96 = vmatprep.subr.mxu0 0.0
    %97 = vmatpush1.msra.mxu0 0.0
    %98 = vmatprep.subr.mxu0 0.0
    %99 = vmatpush1.msra.mxu0 0.0
    %100 = vmatprep.subr.mxu0 0.0
    %101 = vmatpush1.msra.mxu0 0.0
    %102 = vmatprep.subr.mxu0 0.0
    %103 = vmatpush1.msra.mxu0 0.0
    %104 = vmatprep.subr.mxu0 0.0
    %105 = vmatpush1.msra.mxu0 0.0
    %106 = vmatprep.subr.mxu0 0.0
    %107 = vmatpush1.msra.mxu0 0.0
    %108 = vmatprep.subr.mxu0 0.0
    %109 = vmatpush1.msra.mxu0 0.0
    %110 = vmatprep.subr.mxu0 0.0
    %111 = vmatpush1.msra.mxu0 0.0
    %112 = vmatprep.subr.mxu0 0.0
    %113 = vmatpush1.msra.mxu0 0.0
    %114 = vmatprep.subr.mxu0 0.0
    %115 = vmatpush1.msra.mxu0 0.0
    %116 = vmatprep.subr.mxu0 0.0
    %117 = vmatpush1.msra.mxu0 0.0
    %118 = vmatprep.subr.mxu0 0.0
    %119 = vmatpush1.msra.mxu0 0.0
    %120 = vmatprep.subr.mxu0 0.0
    %121 = vmatpush1.msra.mxu0 0.0
    %122 = vmatprep.subr.mxu0 0.0
    %123 = vmatpush1.msra.mxu0 0.0
    %124 = vmatprep.subr.mxu0 0.0
    %125 = vmatpush1.msra.mxu0 0.0
    %126 = vmatprep.subr.mxu0 0.0
    %127 = vmatpush1.msra.mxu0 0.0
    %128 = vmatprep.subr.mxu0 0.0
    %129 = vmatpush1.msra.mxu0 0.0
    %130 = vmatprep.mubr.f32.mxu0 0.0
    %131 = vmatmul.mubr.f32.gmra.mrb[0].mxu0 %v55
    %v132 = vpop.f32.mrb[0].mxu0
    %v133 = vadd.f32 %v36, %v132
    %v134 = vpop.f32.mrb[0].mxu0
    %135 = vmatprep.mubr.f32.mxu0 0.0
    %136 = vmatmul.mubr.f32.gmra.mrb[0].mxu0 %v58
    %v137 = vpop.f32.mrb[0].mxu0
    %v138 = vadd.f32 %v41, %v137
    %v139 = vpop.f32.mrb[0].mxu0
    %140 = vmatprep.mubr.f32.mxu0 0.0
    %141 = vmatmul.mubr.f32.gmra.mrb[0].mxu0 %v61
    %v142 = vpop.f32.mrb[0].mxu0
    %v143 = vadd.f32 %v46, %v142
    %v144 = vpop.f32.mrb[0].mxu0
    %145 = vmatprep.mubr.f32.mxu0 0.0
    %146 = vmatmul.mubr.f32.gmra.mrb[0].mxu0 %v64
    %v147 = vpop.f32.mrb[0].mxu0
    %v148 = vadd.f32 %v51, %v147
    %v149 = vpop.f32.mrb[0].mxu0
    %150 = vdwg.mxu0
    %v151 = vmax.f32 %v133, 0.0
    %v152 = vmax.f32 %v138, 0.0
    %v153 = vmax.f32 %v143, 0.0
    %v154 = vmax.f32 %v148, 0.0
    %156 = vset.pattern.permute.xlu0 0
    %157 = vperm.xlu0 %156, %v30
    %v158 = vpop.permute.xlu0 %157
    %vm160 = vcmask 261120
    %v162 = vsel %vm160, %v29, 0
    %164 = vmatprep.subr.mxu0 0.0
    %165 = vmatpush1.msra.mxu0 %v151
    %166 = vmatprep.subr.mxu0 0.0
    %167 = vmatpush1.msra.mxu0 %v152
    %168 = vmatprep.subr.mxu0 0.0
    %169 = vmatpush1.msra.mxu0 %v153
    %170 = vmatprep.subr.mxu0 0.0
    %171 = vmatpush1.msra.mxu0 %v154
    %172 = vmatprep.subr.mxu0 0.0
    %173 = vmatpush1.msra.mxu0 0.0
    %174 = vmatprep.subr.mxu0 0.0
    %175 = vmatpush1.msra.mxu0 0.0
    %176 = vmatprep.subr.mxu0 0.0
    %177 = vmatpush1.msra.mxu0 0.0
    %178 = vmatprep.subr.mxu0 0.0
    %179 = vmatpush1.msra.mxu0 0.0
    %180 = vmatprep.subr.mxu0 0.0
    %181 = vmatpush1.msra.mxu0 0.0
    %182 = vmatprep.subr.mxu0 0.0
    %183 = vmatpush1.msra.mxu0 0.0
    %184 = vmatprep.subr.mxu0 0.0
    %185 = vmatpush1.msra.mxu0 0.0
    %186 = vmatprep.subr.mxu0 0.0
    %187 = vmatpush1.msra.mxu0 0.0
    %188 = vmatprep.subr.mxu0 0.0
    %189 = vmatpush1.msra.mxu0 0.0
    %190 = vmatprep.subr.mxu0 0.0
    %191 = vmatpush1.msra.mxu0 0.0
    %192 = vmatprep.subr.mxu0 0.0
    %193 = vmatpush1.msra.mxu0 0.0
    %194 = vmatprep.subr.mxu0 0.0
    %195 = vmatpush1.msra.mxu0 0.0
    %196 = vmatprep.subr.mxu0 0.0
    %197 = vmatpush1.msra.mxu0 0.0
    %198 = vmatprep.subr.mxu0 0.0
    %199 = vmatpush1.msra.mxu0 0.0
    %200 = vmatprep.subr.mxu0 0.0
    %201 = vmatpush1.msra.mxu0 0.0
    %202 = vmatprep.subr.mxu0 0.0
    %203 = vmatpush1.msra.mxu0 0.0
    %204 = vmatprep.subr.mxu0 0.0
    %205 = vmatpush1.msra.mxu0 0.0
    %206 = vmatprep.subr.mxu0 0.0
    %207 = vmatpush1.msra.mxu0 0.0
    %208 = vmatprep.subr.mxu0 0.0
    %209 = vmatpush1.msra.mxu0 0.0
    %210 = vmatprep.subr.mxu0 0.0
    %211 = vmatpush1.msra.mxu0 0.0
    %212 = vmatprep.subr.mxu0 0.0
    %213 = vmatpush1.msra.mxu0 0.0
    %214 = vmatprep.subr.mxu0 0.0
    %215 = vmatpush1.msra.mxu0 0.0
    %216 = vmatprep.subr.mxu0 0.0
    %217 = vmatpush1.msra.mxu0 0.0
    %218 = vmatprep.subr.mxu0 0.0
    %219 = vmatpush1.msra.mxu0 0.0
    %220 = vmatprep.subr.mxu0 0.0
    %221 = vmatpush1.msra.mxu0 0.0
    %222 = vmatprep.subr.mxu0 0.0
    %223 = vmatpush1.msra.mxu0 0.0
    %224 = vmatprep.subr.mxu0 0.0
    %225 = vmatpush1.msra.mxu0 0.0
    %226 = vmatprep.subr.mxu0 0.0
    %227 = vmatpush1.msra.mxu0 0.0
    %228 = vmatprep.mubr.f32.mxu0 0.0
    %229 = vmatmul.mubr.f32.gmra.mrb[0].mxu0 %v162
    %v230 = vpop.f32.mrb[0].mxu0
    %v231 = vadd.f32 %v158, %v230
    %v232 = vpop.f32.mrb[0].mxu0
    %233 = vdwg.mxu0
    %v234 = vsel %vm53, %v231, -inf
    %v235 = vrot.slane %v234, 4
    %v236 = vmax.f32 %v234, %v235
    %v237 = vrot.slane %v236, 2
    %v238 = vmax.f32 %v236, %v237
    %v239 = vrot.slane %v238, 1
    %v240 = vmax.f32 %v238, %v239
    %v241 = vsub.f32 %v231, %v240
    %v242 = vmul.f32 %v241, 1.442695
    %v243 = vpow.pop %v242
    %v244 = vsel %vm53, %v243, 0.0
    %v245 = vrot.slane %v244, 4
    %v246 = vadd.f32 %v244, %v245
    %v247 = vrot.slane %v246, 2
    %v248 = vadd.f32 %v246, %v247
    %v249 = vrot.slane %v248, 1
    %v250 = vadd.f32 %v248, %v249
    %v251 = vrcp.pop %v250
    %v252 = vmul.f32 %v243, %v251
    %253 = vst.msk [vmem:[#allocation2] sm:$0xff] %vm53, %v252
    // Predicated region
    $region22: #{tpu_custom_call.1} parent=1 // pred_check
      _
    $region23: #{tpu_custom_call.1} parent=1 // pred_check_branch
      %255 = sbr.rel (0) target = $region25
    $region24: #{tpu_custom_call.1} parent=1 // pred_region
      %s257 = ssub.s32 128, 128
      %258 = vsyncadd [#allocation3], %s257
      %s260 = sshll.u32 [#allocation2], 4
      %s261 = int_to_ptr.vmem [resolvable:$true] %s260
      %263 = dma.vmem_to_hbm [thread:$0]  %s261, 128, %s5, [#allocation3]
    $region25: #{tpu_custom_call.1} parent=1 // pred_fallthru
      _
    // Predicated region
    $region26: #{tpu_custom_call.1} parent=1 // pred_check
      _
    $region27: #{tpu_custom_call.1} parent=1 // pred_check_branch
      %265 = sbr.rel (0) target = $region29
    $region28: #{tpu_custom_call.1} parent=1 // pred_region
      %266 = dma.done [#allocation3], 128
    $region29: #{tpu_custom_call.1} parent=1 // pred_fallthru
      _
    %267 = vsyncpa [#allocation3], 1

</llo_original>
